<compile_context>
chip_gen: v6e
topology: v6e:2x2x1
jax: 0.10.0
libtpu: 0.0.40
codegen_flags: <defaults>
</compile_context>

<pallas_src>
import numpy as np

import jax
import jax.numpy as jnp
from jax.experimental import pallas as pl
from jax.experimental.pallas import tpu as pltpu

_LANES = 128              # vreg lane width; last dim of the lane-dense view.
_SUBLANES = 8             # f32 sublane tile.
_MAX_BLOCK_ROWS = 4096    # 4096*128*4 B = 2 MiB per f32 buffer.
_MIN_PALLAS_BYTES = 1 << 20  # below ~1 MiB let XLA fuse the add.


def get_sinusoid_encoding_table(L: int) -> jnp.ndarray:
    """table[pos] = [sin(pos), cos(pos)], shape (1, L+1, 2).

    Computed in float64 numpy then cast to float32, matching the torch buffer
    (np.sin/np.cos on a float64 table -> FloatTensor) bit-for-bit.
    """
    pos = np.arange(L + 1, dtype=np.float64)
    tab = np.stack([np.sin(pos), np.cos(pos)], axis=-1)  # (L+1, 2)
    return jnp.asarray(tab[None, :, :], dtype=jnp.float32)


def _round_up(a: int, b: int) -> int:
    return -(-a // b) * b


def _pos_enc_kernel(x_ref, pe_ref, o_ref):
    # Lane-dense broadcast add on the VPU:
    #   x_ref: (block_rows, 128) tile, pe_ref: (1, 128) -> broadcasts over rows.
    o_ref[...] = x_ref[...] + pe_ref[...]


class PositionalEncoder:
    """JAX/Pallas port of the PyTorch PositionalEncoder."""

    def __init__(self, L: int, max_block_rows: int = _MAX_BLOCK_ROWS,
                 min_pallas_bytes: int = _MIN_PALLAS_BYTES):
        self.L = L
        self.max_block_rows = max_block_rows
        self.min_pallas_bytes = min_pallas_bytes
        self.pos_table = get_sinusoid_encoding_table(L)  # (1, L+1, 2) f32
        self._pe_cache = {}  # (S, dtype name) -> (1, 128) lane-dense PE tile

    def _pe_lane_tile(self, S: int, dtype) -> jnp.ndarray:
        """(1, 128) tile [sin(S), cos(S), ...] taken from pos_table, cached."""
        key = (int(S), jnp.dtype(dtype).name)
        if key not in self._pe_cache:
            row = jnp.tile(self.pos_table[0, S].astype(dtype), _LANES // 2)
            self._pe_cache[key] = row.reshape(1, _LANES)
        return self._pe_cache[key]

    def __call__(self, x: jnp.ndarray, force_pallas: bool = False) -> jnp.ndarray:
        assert x.ndim == 3 and x.shape[-1] == 2, "expected x of shape (B, S, 2)"
        B, S, _ = x.shape
        assert S <= self.L, "x.shape[1] must be <= L to index pos_table"
        dtype = x.dtype
        n = x.size

        # Tiny inputs: the fixed pallas_call launch + DMA setup dwarfs the work.
        n_bytes = n * jnp.dtype(dtype).itemsize
        if not force_pallas and n_bytes < self.min_pallas_bytes:
            return x + self.pos_table[:, S].astype(dtype).reshape(1, 1, 2)

        pe_tile = self._pe_lane_tile(S, dtype)  # (1, 128), cached constant

        # Lane-dense (rows, 128) view of x.
        if n % _LANES == 0:
            # Copy-free: row-major reshape is a pure relayout.
            rows = n // _LANES
            x2d = x.reshape(rows, _LANES)
            padded = False
        else:
            # Pad once to a full (8, 128) tile multiple so the reshape is legal.
            rows = _round_up(pl.cdiv(n, _LANES), _SUBLANES)
            x2d = jnp.pad(x.reshape(-1), (0, rows * _LANES - n)).reshape(rows, _LANES)
            padded = True

        # Block sizing: multiple-of-8 blocks (ragged final block is fine), or a
        # single full-array block when rows < 8 (block == array dims is always legal).
        if rows <= _SUBLANES:
            block_rows = rows
        else:
            block_rows = min(self.max_block_rows, (rows // _SUBLANES) * _SUBLANES)
        num_blocks = pl.cdiv(rows, block_rows)

        out2d = pl.pallas_call(
            _pos_enc_kernel,
            out_shape=jax.ShapeDtypeStruct((rows, _LANES), dtype),
            grid=(num_blocks,),
            in_specs=[
                pl.BlockSpec((block_rows, _LANES), lambda i: (i, 0)),
                pl.BlockSpec((1, _LANES), lambda i: (0, 0)),
            ],
            out_specs=pl.BlockSpec((block_rows, _LANES), lambda i: (i, 0)),
            compiler_params=pltpu.CompilerParams(
                dimension_semantics=("parallel",)),
            # The padded x2d is always a fresh temp -> safe to reuse its HBM
            # buffer for the output (no second full-size allocation).
            input_output_aliases={0: 0} if padded else {},
        )(x2d, pe_tile)

        if padded:
            return out2d.reshape(-1)[:n].reshape(x.shape)
        return out2d.reshape(x.shape)


if __name__ == "__main__":
    key = jax.random.PRNGKey(0)

    # 1) Tiny shape, forced through the Pallas path (padded, single block).
    L, B, S = 8, 2, 8
    x = jax.random.normal(key, (B, S, 2), dtype=jnp.float32)
    enc = PositionalEncoder(L)
    out = jax.block_until_ready(enc(x, force_pallas=True))
    ref = x + enc.pos_table[:, S].reshape(1, 1, 2)
    assert out.shape == x.shape and out.dtype == x.dtype
    assert jnp.allclose(out, ref, atol=1e-6, rtol=1e-6), "pallas path mismatch"

    # 2) Small-size jnp fallback must agree.
    out_fb = jax.block_until_ready(enc(x))
    assert jnp.allclose(out_fb, ref, atol=1e-6, rtol=1e-6), "fallback mismatch"

    # 3) Multi-block grid + tail padding + input/output aliasing.
    L2, S2 = 512, 500
    enc_multi = PositionalEncoder(L2, max_block_rows=8)  # force grid > 1
    x2 = jax.random.normal(jax.random.PRNGKey(0), (2, S2, 2), dtype=jnp.float32)
    out2 = jax.block_until_ready(enc_multi(x2, force_pallas=True))
    ref2 = x2 + enc_multi.pos_table[:, S2].reshape(1, 1, 2)
    assert jnp.allclose(out2, ref2, atol=1e-6, rtol=1e-6), "multi-block mismatch"

    # 4) Lane-aligned, copy-free path with a ragged final grid block
    #    (n = 2*320*2 = 1280 -> rows = 10, block_rows = 8, grid = 2).
    L3, S3 = 512, 320
    enc_ragged = PositionalEncoder(L3)
    x3 = jax.random.normal(jax.random.PRNGKey(1), (2, S3, 2), dtype=jnp.float32)
    out3 = jax.block_until_ready(enc_ragged(x3, force_pallas=True))
    ref3 = x3 + enc_ragged.pos_table[:, S3].reshape(1, 1, 2)
    assert out3.shape == x3.shape and out3.dtype == x3.dtype
    assert jnp.allclose(out3, ref3, atol=1e-6, rtol=1e-6), "ragged-grid mismatch"

    print("KERNEL_OK")
</pallas_src>

<mosaic_0001>
module attributes {stable_mosaic.version = 11 : i64} {
  func.func @_pos_enc_kernel(%arg0: i32, %arg1: memref<8x128xf32, #tpu.memory_space<vmem>>, %arg2: memref<1x128xf32, #tpu.memory_space<vmem>>, %arg3: memref<8x128xf32, #tpu.memory_space<vmem>>) attributes {dimension_semantics = [#tpu.dimension_semantics<parallel>], iteration_bounds = array<i64: 1>, scalar_prefetch = 0 : i64, scratch_operands = 0 : i64, tpu.core_type = #tpu.core_type<tc>, window_params = [{transform_indices = @transform_0, window_bounds = array<i64: 8, 128>}, {pipeline_mode = #tpu.pipeline_mode<synchronous>, transform_indices = @transform_1, window_bounds = array<i64: 1, 128>}, {transform_indices = @transform_2, window_bounds = array<i64: 8, 128>}]} {
    %c0 = arith.constant 0 : index
    %c0_0 = arith.constant 0 : index
    %0 = vector.load %arg1[%c0, %c0_0] : memref<8x128xf32, #tpu.memory_space<vmem>>, vector<8x128xf32>
    %c0_1 = arith.constant 0 : index
    %c0_2 = arith.constant 0 : index
    %1 = vector.load %arg2[%c0_1, %c0_2] : memref<1x128xf32, #tpu.memory_space<vmem>>, vector<1x128xf32>
    %2 = vector.broadcast %1 : vector<1x128xf32> to vector<8x128xf32>
    %3 = arith.addf %0, %2 : vector<8x128xf32>
    %c0_3 = arith.constant 0 : index
    %c0_4 = arith.constant 0 : index
    %4 = vector.load %arg3[%c0_3, %c0_4] : memref<8x128xf32, #tpu.memory_space<vmem>>, vector<8x128xf32>
    tpu.vector_store %arg3[%c0_3, %c0_4], %3 {strides = array<i32>} : memref<8x128xf32, #tpu.memory_space<vmem>>, vector<8x128xf32>,
    return
  }
  func.func @transform_0(%arg0: i32) -> (i32, i32) {
    %c0_i32 = arith.constant 0 : i32
    %c0_i32_0 = arith.constant 0 : i32
    return %arg0, %c0_i32 : i32, i32
  }
  func.func @transform_1(%arg0: i32) -> (i32, i32) {
    %c0_i32 = arith.constant 0 : i32
    %c0_i32_0 = arith.constant 0 : i32
    %c0_i32_1 = arith.constant 0 : i32
    return %c0_i32, %c0_i32_0 : i32, i32
  }
  func.func @transform_2(%arg0: i32) -> (i32, i32) {
    %c0_i32 = arith.constant 0 : i32
    %c0_i32_0 = arith.constant 0 : i32
    return %arg0, %c0_i32 : i32, i32
  }
}

</mosaic_0001>

<llo_original>
// kernel: tpu_custom_call.1
$region0: #{tpu_custom_call.1}
  #allocation0 [shape = 'u32[]', space=smem, size = 0x4, offset = 0x4, fixed_abs, tag = 'smem constant byte address 0x4 - core index']
  #allocation1 [shape = 'u32[144,128]{1,0:T(1,128)}', space=vmem, size = 0x12000, scoped, tag = 'internal scratch']
  %s0 = inlined_call_operand.hbm [shape: f32[8,128], index: 0, kind: input, shape index: {}, may-alias: {0,2}]
  %s1 = inlined_call_operand.vmem [shape: f32[1,128], index: 1, kind: input, shape index: {}]
  %s2 = inlined_call_operand.hbm [shape: f32[8,128], index: 2, kind: output, shape index: {}, may-alias: {0,2}]
  %s3 = sld [smem:[#allocation0]]
  $region22: #{tpu_custom_call.1} parent=0
    _
  %s5 = ssub.s32 1, %s3
  %s6 = scalar_select 0, %s5, %s3
  $region1: #{tpu_custom_call.1} parent=0
    #allocation2 [shape = 'u8[4096]{0}', space=vmem, size = 0x1000, scoped, tag = 'input window, operand 0, single buffered']
    #allocation3 [shape = 's32[1]{0}', space=sflag, size = 0x4, scoped, tag = 'scoped memory for tpu_custom_call.1']
    #allocation4 [shape = 's32[1]{0}', space=sflag, size = 0x4, scoped, tag = 'scoped memory for tpu_custom_call.1']
    #allocation5 [shape = 'u8[4096]{0}', space=vmem, size = 0x1000, scoped, tag = 'output window, operand 0, single buffered']
    %7 = vsyncpa [#allocation3], 0
    %8 = vsyncpa [#allocation4], 0
    // Predicated region
    $region2: #{tpu_custom_call.1} parent=1 // pred_check
      _
    $region3: #{tpu_custom_call.1} parent=1 // pred_check_branch
      %10 = sbr.rel (0) target = $region5
    $region4: #{tpu_custom_call.1} parent=1 // pred_region
      %s12 = ssub.s32 128, 128
      %13 = vsyncadd [#allocation3], %s12
      %s15 = sshll.u32 [#allocation2], 4
      %s16 = int_to_ptr.vmem [resolvable:$true] %s15
      %18 = dma.hbm_to_vmem [thread:$0]  %s0, 128, %s16, [#allocation3]
    $region5: #{tpu_custom_call.1} parent=1 // pred_fallthru
      _
    // Predicated region
    $region6: #{tpu_custom_call.1} parent=1 // pred_check
      _
    $region7: #{tpu_custom_call.1} parent=1 // pred_check_branch
      %20 = sbr.rel (0) target = $region9
    $region8: #{tpu_custom_call.1} parent=1 // pred_region
      _
    $region9: #{tpu_custom_call.1} parent=1 // pred_fallthru
      _
    // Predicated region
    $region10: #{tpu_custom_call.1} parent=1 // pred_check
      _
    $region11: #{tpu_custom_call.1} parent=1 // pred_check_branch
      %22 = sbr.rel (0) target = $region13
    $region12: #{tpu_custom_call.1} parent=1 // pred_region
      %23 = dma.done [#allocation3], 128
    $region13: #{tpu_custom_call.1} parent=1 // pred_fallthru
      _
    %v24 = vld [vmem:[#allocation2] sm:$0xff]
    %v25 = vld [vmem:[%s1] sm:$0x1]
    %v27 = vlaneseq
    %v28 = vshrl.u32 %v27, 7
    %v29 = vsub.s32 0, %v28
    %v30 = vrot.slane %v25, %v29
    %v32 = vadd.f32 %v24, %v30
    %33 = vst [vmem:[#allocation5] sm:$0xff] %v32
    // Predicated region
    $region14: #{tpu_custom_call.1} parent=1 // pred_check
      _
    $region15: #{tpu_custom_call.1} parent=1 // pred_check_branch
      %35 = sbr.rel (0) target = $region17
    $region16: #{tpu_custom_call.1} parent=1 // pred_region
      %s37 = ssub.s32 128, 128
      %38 = vsyncadd [#allocation4], %s37
      %s40 = sshll.u32 [#allocation5], 4
      %s41 = int_to_ptr.vmem [resolvable:$true] %s40
      %43 = dma.vmem_to_hbm [thread:$0]  %s41, 128, %s2, [#allocation4]
    $region17: #{tpu_custom_call.1} parent=1 // pred_fallthru
      _
    // Predicated region
    $region18: #{tpu_custom_call.1} parent=1 // pred_check
      _
    $region19: #{tpu_custom_call.1} parent=1 // pred_check_branch
      %45 = sbr.rel (0) target = $region21
    $region20: #{tpu_custom_call.1} parent=1 // pred_region
      %46 = dma.done [#allocation4], 128
    $region21: #{tpu_custom_call.1} parent=1 // pred_fallthru
      _
    %47 = vsyncpa [#allocation3], 1
    %48 = vsyncpa [#allocation4], 1

</llo_original>
